<compile_context>
chip_gen: v5e
topology: v5e:2x2
jax: 0.10.0
libtpu: 0.0.40
codegen_flags: <defaults>
</compile_context>

<pallas_src>
import jax
import jax.numpy as jnp
from jax.experimental import pallas as pl
from jax.experimental.pallas import tpu as pltpu

LANE = 128  # lane width: intermediate H is padded to this so it stays lane-dense


def _round_up(n, m):
    return ((n + m - 1) // m) * m


def _late_fusion_kernel(x_ref, wf_ref, bf_ref, w2_ref, b2_ref, out_ref):
    # x streams in at native width / f32; cast to the matmul operand dtype on
    # the VPU (free under a DMA-bound regime).
    x = x_ref[...].astype(wf_ref.dtype)                        # (TB, D_in) bf16

    # Fused encoders + MLP layer 1 (W_f = W_enc @ W1), f32 accumulation.
    h = jnp.dot(x, wf_ref[...], preferred_element_type=jnp.float32)
    h = jnp.maximum(h + bf_ref[...], 0.0)                      # (TB, H_p) f32

    # MLP layer 2; output written at true (unpadded) width.
    out = jnp.dot(h.astype(w2_ref.dtype), w2_ref[...],
                  preferred_element_type=jnp.float32)
    out_ref[...] = (out + b2_ref[...]).astype(out_ref.dtype)   # (TB, C)


def prepare_late_fusion_params(enc_weights, enc_biases, w1, b1, w2, b2,
                               compute_dtype=jnp.bfloat16):
    """One-time parameter prep (hoisted out of the forward path).

    torch.cat of the per-modality Linear outputs along dim=1 == one Linear
    whose weight is the per-modality weights concatenated along the output
    axis.  That fused encoder Linear then folds algebraically (exact in f32)
    into MLP layer 1.  Only the intermediate dim H is padded to a lane
    multiple; the x-side (D_in) and output-side (C) dims stay at true width.
    """
    w_enc = jnp.concatenate(enc_weights, axis=1).astype(jnp.float32)  # (D_in, M*D_enc)
    b_enc = jnp.concatenate(enc_biases, axis=0).astype(jnp.float32)   # (M*D_enc,)

    w1f = w1.astype(jnp.float32)
    w_f = w_enc @ w1f                                  # (D_in, H)
    b_f = b_enc @ w1f + b1.astype(jnp.float32)         # (H,)

    d_in, h_dim = w_f.shape
    c_dim = w2.shape[1]
    h_p = _round_up(h_dim, LANE)   # intermediate stays lane-dense in VMEM

    arrays = dict(
        w_f=jnp.pad(w_f, ((0, 0), (0, h_p - h_dim))).astype(compute_dtype),
        b_f=jnp.pad(b_f, (0, h_p - h_dim))[None, :].astype(jnp.float32),
        w2=jnp.pad(w2, ((0, h_p - h_dim), (0, 0))).astype(compute_dtype),
        b2=b2[None, :].astype(jnp.float32),
    )
    dims = dict(d_in=int(d_in), c=int(c_dim))
    return arrays, dims


def late_fusion_forward(x, arrays, dims, *, tb=1024):
    """x: (B, D_in) float32.  `tb` = batch rows per grid step (sweep upward for
    large B; VMEM-resident weights are reused across steps)."""
    w_f, b_f, w2, b2 = arrays["w_f"], arrays["b_f"], arrays["w2"], arrays["b2"]
    d_in, c_dim = dims["d_in"], dims["c"]
    assert x.shape[1] == d_in, (x.shape, d_in)

    B = x.shape[0]
    h_p = w_f.shape[1]

    # Batch tile: multiple of 8; cap so the "parallel" batch grid has >= 2
    # steps when B allows it (keeps both v7x TensorCores busy).
    tb = max(8, (tb // 8) * 8)
    tb = min(tb, _round_up(pl.cdiv(B, 2), 8))
    if tb >= B:
        tb = B                      # single full-batch block (block == array dim)
    grid = (pl.cdiv(B, tb),)        # ragged last tile -> masked edge writes

    vmem = pltpu.MemorySpace.VMEM
    x_spec = pl.BlockSpec((tb, d_in), lambda i: (i, 0), memory_space=vmem)
    out_spec = pl.BlockSpec((tb, c_dim), lambda i: (i, 0), memory_space=vmem)
    # Weights/biases: constant index_map -> VMEM-resident across grid steps.
    const = lambda a: pl.BlockSpec(a.shape, lambda i: (0, 0), memory_space=vmem)

    flops = 2 * B * (d_in * h_p + h_p * c_dim)
    bytes_accessed = (
        B * d_in * x.dtype.itemsize
        + sum(int(a.size) * a.dtype.itemsize for a in (w_f, b_f, w2, b2))
        + B * c_dim * 4)

    out = pl.pallas_call(
        _late_fusion_kernel,
        out_shape=jax.ShapeDtypeStruct((B, c_dim), jnp.float32),
        grid=grid,
        in_specs=[x_spec, const(w_f), const(b_f), const(w2), const(b2)],
        out_specs=out_spec,
        compiler_params=pltpu.CompilerParams(
            dimension_semantics=("parallel",)),
        cost_estimate=pl.CostEstimate(
            flops=flops, transcendentals=0, bytes_accessed=bytes_accessed),
    )(x, w_f, b_f, w2, b2)
    return out


def _reference(x, enc_weights, enc_biases, w1, b1, w2, b2):
    tokens = [x @ w + b for w, b in zip(enc_weights, enc_biases)]
    tokens = jnp.concatenate(tokens, axis=1)
    h = jnp.maximum(tokens @ w1 + b1, 0.0)
    return h @ w2 + b2


if __name__ == "__main__":
    # TODO(synk): the config-injected AnySat encoders/MLP are concretized here
    # as Linear encoders + Linear->ReLU->Linear MLP; non-linear encoders would
    # break the fold-into-one-kernel identity and need a different kernel.
    modalities = ["s2", "s1", "aerial"]   # 3 modalities
    # B chosen as a non-multiple of the tile to exercise the ragged last block.
    B, D_in, D_enc, H, C = 500, 32, 16, 64, 10

    key = jax.random.PRNGKey(0)
    keys = jax.random.split(key, 2 * len(modalities) + 5)

    x = jax.random.normal(keys[0], (B, D_in), dtype=jnp.float32)

    enc_weights, enc_biases = [], []
    for i, _m in enumerate(modalities):
        enc_weights.append(
            0.1 * jax.random.normal(keys[1 + 2 * i], (D_in, D_enc), jnp.float32))
        enc_biases.append(
            0.1 * jax.random.normal(keys[2 + 2 * i], (D_enc,), jnp.float32))

    w1 = 0.1 * jax.random.normal(keys[-4], (len(modalities) * D_enc, H), jnp.float32)
    b1 = 0.1 * jax.random.normal(keys[-3], (H,), jnp.float32)
    w2 = 0.1 * jax.random.normal(keys[-2], (H, C), jnp.float32)
    b2 = 0.1 * jax.random.normal(keys[-1], (C,), jnp.float32)

    # One-time parameter fusion (concat + encoder->MLP1 fold) / pad / bf16 cast.
    arrays, dims = prepare_late_fusion_params(
        enc_weights, enc_biases, w1, b1, w2, b2)

    out = late_fusion_forward(x, arrays, dims, tb=1024)
    out = jax.block_until_ready(out)

    ref = _reference(x, enc_weights, enc_biases, w1, b1, w2, b2)
    assert out.shape == (B, C), out.shape
    # bf16 MXU operands with f32 accumulation -> looser tolerance than pure f32.
    assert jnp.allclose(out, ref, atol=2e-2, rtol=2e-2), (
        "mismatch vs reference; max abs err = "
        f"{float(jnp.max(jnp.abs(out - ref)))}")

    print("KERNEL_OK")
</pallas_src>

<mosaic_0001>
module attributes {stable_mosaic.version = 11 : i64} {
  func.func @_late_fusion_kernel(%arg0: i32, %arg1: memref<256x32xf32, #tpu.memory_space<vmem>>, %arg2: memref<32x128xbf16, #tpu.memory_space<vmem>>, %arg3: memref<1x128xf32, #tpu.memory_space<vmem>>, %arg4: memref<128x10xbf16, #tpu.memory_space<vmem>>, %arg5: memref<1x10xf32, #tpu.memory_space<vmem>>, %arg6: memref<256x10xf32, #tpu.memory_space<vmem>>) attributes {dimension_semantics = [#tpu.dimension_semantics<parallel>], iteration_bounds = array<i64: 2>, scalar_prefetch = 0 : i64, scratch_operands = 0 : i64, tpu.core_type = #tpu.core_type<tc>, window_params = [{transform_indices = @transform_0, window_bounds = array<i64: 256, 32>}, {pipeline_mode = #tpu.pipeline_mode<synchronous>, transform_indices = @transform_1, window_bounds = array<i64: 32, 128>}, {pipeline_mode = #tpu.pipeline_mode<synchronous>, transform_indices = @transform_2, window_bounds = array<i64: 1, 128>}, {pipeline_mode = #tpu.pipeline_mode<synchronous>, transform_indices = @transform_3, window_bounds = array<i64: 128, 10>}, {pipeline_mode = #tpu.pipeline_mode<synchronous>, transform_indices = @transform_4, window_bounds = array<i64: 1, 10>}, {transform_indices = @transform_5, window_bounds = array<i64: 256, 10>}]} {
    %c0 = arith.constant 0 : index
    %c0_0 = arith.constant 0 : index
    %0 = vector.load %arg1[%c0, %c0_0] : memref<256x32xf32, #tpu.memory_space<vmem>>, vector<256x32xf32>
    %1 = arith.truncf %0 : vector<256x32xf32> to vector<256x32xbf16>
    %c0_1 = arith.constant 0 : index
    %c0_2 = arith.constant 0 : index
    %2 = vector.load %arg2[%c0_1, %c0_2] : memref<32x128xbf16, #tpu.memory_space<vmem>>, vector<32x128xbf16>
    %cst = arith.constant dense<0.000000e+00> : vector<256x128xf32>
    %3 = tpu.matmul %1, %2, %cst {dimension_numbers = #tpu.dot_dimension_numbers<[1], [0], [0], [1], [0, 0, 1, 1], [], []>} : vector<256x32xbf16>, vector<32x128xbf16>, vector<256x128xf32> -> vector<256x128xf32>
    %c0_3 = arith.constant 0 : index
    %c0_4 = arith.constant 0 : index
    %4 = vector.load %arg3[%c0_3, %c0_4] : memref<1x128xf32, #tpu.memory_space<vmem>>, vector<1x128xf32>
    %5 = vector.broadcast %4 : vector<1x128xf32> to vector<256x128xf32>
    %6 = arith.addf %3, %5 : vector<256x128xf32>
    %cst_5 = arith.constant 0.000000e+00 : f32
    %7 = vector.broadcast %cst_5 : f32 to vector<256x128xf32>
    %8 = arith.maximumf %6, %7 : vector<256x128xf32>
    %9 = arith.truncf %8 : vector<256x128xf32> to vector<256x128xbf16>
    %c0_6 = arith.constant 0 : index
    %c0_7 = arith.constant 0 : index
    %10 = vector.load %arg4[%c0_6, %c0_7] : memref<128x10xbf16, #tpu.memory_space<vmem>>, vector<128x10xbf16>
    %cst_8 = arith.constant dense<0.000000e+00> : vector<256x10xf32>
    %11 = tpu.matmul %9, %10, %cst_8 {dimension_numbers = #tpu.dot_dimension_numbers<[1], [0], [0], [1], [0, 0, 1, 1], [], []>} : vector<256x128xbf16>, vector<128x10xbf16>, vector<256x10xf32> -> vector<256x10xf32>
    %c0_9 = arith.constant 0 : index
    %c0_10 = arith.constant 0 : index
    %12 = vector.load %arg5[%c0_9, %c0_10] : memref<1x10xf32, #tpu.memory_space<vmem>>, vector<1x10xf32>
    %13 = vector.broadcast %12 : vector<1x10xf32> to vector<256x10xf32>
    %14 = arith.addf %11, %13 : vector<256x10xf32>
    %c0_11 = arith.constant 0 : index
    %c0_12 = arith.constant 0 : index
    %15 = vector.load %arg6[%c0_11, %c0_12] : memref<256x10xf32, #tpu.memory_space<vmem>>, vector<256x10xf32>
    tpu.vector_store %arg6[%c0_11, %c0_12], %14 {strides = array<i32>} : memref<256x10xf32, #tpu.memory_space<vmem>>, vector<256x10xf32>,
    return
  }
  func.func @transform_0(%arg0: i32) -> (i32, i32) {
    %c0_i32 = arith.constant 0 : i32
    %c0_i32_0 = arith.constant 0 : i32
    return %arg0, %c0_i32 : i32, i32
  }
  func.func @transform_1(%arg0: i32) -> (i32, i32) {
    %c0_i32 = arith.constant 0 : i32
    %c0_i32_0 = arith.constant 0 : i32
    %c0_i32_1 = arith.constant 0 : i32
    return %c0_i32, %c0_i32_0 : i32, i32
  }
  func.func @transform_2(%arg0: i32) -> (i32, i32) {
    %c0_i32 = arith.constant 0 : i32
    %c0_i32_0 = arith.constant 0 : i32
    %c0_i32_1 = arith.constant 0 : i32
    return %c0_i32, %c0_i32_0 : i32, i32
  }
  func.func @transform_3(%arg0: i32) -> (i32, i32) {
    %c0_i32 = arith.constant 0 : i32
    %c0_i32_0 = arith.constant 0 : i32
    %c0_i32_1 = arith.constant 0 : i32
    return %c0_i32, %c0_i32_0 : i32, i32
  }
  func.func @transform_4(%arg0: i32) -> (i32, i32) {
    %c0_i32 = arith.constant 0 : i32
    %c0_i32_0 = arith.constant 0 : i32
    %c0_i32_1 = arith.constant 0 : i32
    return %c0_i32, %c0_i32_0 : i32, i32
  }
  func.func @transform_5(%arg0: i32) -> (i32, i32) {
    %c0_i32 = arith.constant 0 : i32
    %c0_i32_0 = arith.constant 0 : i32
    return %arg0, %c0_i32 : i32, i32
  }
}

</mosaic_0001>

<llo_original>
// kernel: tpu_custom_call.1
$region0: #{tpu_custom_call.1}
  #allocation0 [shape = 'u32[]', space=smem, size = 0x4, offset = 0x4, fixed_abs, tag = 'smem constant byte address 0x4 - core index']
  #allocation1 [shape = 'u32[72,128]{1,0:T(1,128)}', space=vmem, size = 0x9000, scoped, tag = 'internal scratch']
  %s0 = inlined_call_operand.vmem [shape: f32[500,32], index: 0, kind: input, shape index: {}]
  %s1 = inlined_call_operand.vmem [shape: bf16[32,128], index: 1, kind: input, shape index: {}]
  %s2 = inlined_call_operand.vmem [shape: f32[1,128], index: 2, kind: input, shape index: {}]
  %s3 = inlined_call_operand.vmem [shape: bf16[128,10], index: 3, kind: input, shape index: {}]
  %s4 = inlined_call_operand.vmem [shape: f32[1,10], index: 4, kind: input, shape index: {}]
  %s5 = inlined_call_operand.vmem [shape: f32[500,10], index: 5, kind: output, shape index: {}]
  %s6 = sld [smem:[#allocation0]]
  $region101: #{tpu_custom_call.1} parent=0
    _
  %s8 = ssub.s32 1, %s6
  %s9 = scalar_select 0, %s8, %s6
  $region1: #{tpu_custom_call.1} parent=0
    #allocation2 [shape = 'u8[262144]{0}', space=vmem, size = 0x40000, scoped, tag = 'output window, operand 0']
    loop: start=0, step=1, limit=4
    $region2: #{tpu_custom_call.1} parent=1 // loop_pre_header
      _
    $region3: #{tpu_custom_call.1} parent=1 // loop_header
      %s11 = sphi 0, %s15
      %p12 = scmp.ge.s32.totalorder %s11, 4
      %s21 = sphi 0, %s23
      %s24 = sphi 0, %s21
      %s25 = sphi 0, %s24
      %s41 = sphi 0, %s25
      %s45 = sphi 0, %s45
      %s47 = sphi 0, %s45
      %s48 = sphi 0, %s47
      %s62 = sphi 0, %s48
      %s66 = sphi 0, %s66
      %s68 = sphi 0, %s66
      %s69 = sphi 0, %s68
      %s83 = sphi 0, %s69
      %s87 = sphi 0, %s87
      %s89 = sphi 0, %s87
      %s90 = sphi 0, %s89
      %s104 = sphi 0, %s90
      %s108 = sphi 0, %s108
      %s110 = sphi 0, %s108
      %s111 = sphi 0, %s110
      %s125 = sphi 0, %s111
      %s131 = sphi 0, %s133
      %s134 = sphi 0, %s131
      %s135 = sphi 0, %s134
      %s151 = sphi 0, %s135
    $region4: #{tpu_custom_call.1} parent=1 // loop_header_branch
      %14 = sbr.rel (%p12) target = $region8
    $region5: #{tpu_custom_call.1} parent=1 // loop_body
      %s16 = ssub.s32 %s11, 1
      %s17 = ssub.s32 %s11, 2
      %s18 = sadd.s32 %s11, 1
      %s19 = ssub.s32 %s11, %s18
      %p20 = scmp.eq.s32.totalorder %s19, 0
      %s22 = sadd.s32 %s21, 1
      %s23 = scalar_select %p20, %s21, %s22
      %p26 = pneg %p20
      %p27 = scmp.eq.s32.totalorder %s11, 1
      %p28 = por %p26, %p27
      %p29 = scmp.ne.s32.totalorder %s21, %s24
      %p30 = scmp.eq.s32.totalorder %s11, 0
      %p31 = por %p29, %p30
      %p32 = scmp.ne.s32.totalorder %s21, %s24
      %p33 = scmp.eq.s32.totalorder %s16, 1
      %p34 = por %p32, %p33
      %p35 = scmp.ne.s32.totalorder %s24, %s25
      %p36 = scmp.eq.s32.totalorder %s16, 0
      %p37 = por %p35, %p36
      %p38 = scmp.ne.s32.totalorder %s24, %s25
      %p39 = scmp.eq.s32.totalorder %s17, 1
      %p40 = por %p38, %p39
      %p42 = scmp.ne.s32.totalorder %s25, %s41
      %p43 = scmp.eq.s32.totalorder %s17, 0
      %p44 = por %p42, %p43
      %s46 = sadd.s32 %s45, 1
      %p49 = scmp.eq.s32.totalorder %s11, 1
      %p50 = scmp.ne.s32.totalorder %s45, %s47
      %p51 = scmp.eq.s32.totalorder %s11, 0
      %p52 = por %p50, %p51
      %p53 = scmp.ne.s32.totalorder %s45, %s47
      %p54 = scmp.eq.s32.totalorder %s16, 1
      %p55 = por %p53, %p54
      %p56 = scmp.ne.s32.totalorder %s47, %s48
      %p57 = scmp.eq.s32.totalorder %s16, 0
      %p58 = por %p56, %p57
      %p59 = scmp.ne.s32.totalorder %s47, %s48
      %p60 = scmp.eq.s32.totalorder %s17, 1
      %p61 = por %p59, %p60
      %p63 = scmp.ne.s32.totalorder %s48, %s62
      %p64 = scmp.eq.s32.totalorder %s17, 0
      %p65 = por %p63, %p64
      %s67 = sadd.s32 %s66, 1
      %p70 = scmp.eq.s32.totalorder %s11, 1
      %p71 = scmp.ne.s32.totalorder %s66, %s68
      %p72 = scmp.eq.s32.totalorder %s11, 0
      %p73 = por %p71, %p72
      %p74 = scmp.ne.s32.totalorder %s66, %s68
      %p75 = scmp.eq.s32.totalorder %s16, 1
      %p76 = por %p74, %p75
      %p77 = scmp.ne.s32.totalorder %s68, %s69
      %p78 = scmp.eq.s32.totalorder %s16, 0
      %p79 = por %p77, %p78
      %p80 = scmp.ne.s32.totalorder %s68, %s69
      %p81 = scmp.eq.s32.totalorder %s17, 1
      %p82 = por %p80, %p81
      %p84 = scmp.ne.s32.totalorder %s69, %s83
      %p85 = scmp.eq.s32.totalorder %s17, 0
      %p86 = por %p84, %p85
      %s88 = sadd.s32 %s87, 1
      %p91 = scmp.eq.s32.totalorder %s11, 1
      %p92 = scmp.ne.s32.totalorder %s87, %s89
      %p93 = scmp.eq.s32.totalorder %s11, 0
      %p94 = por %p92, %p93
      %p95 = scmp.ne.s32.totalorder %s87, %s89
      %p96 = scmp.eq.s32.totalorder %s16, 1
      %p97 = por %p95, %p96
      %p98 = scmp.ne.s32.totalorder %s89, %s90
      %p99 = scmp.eq.s32.totalorder %s16, 0
      %p100 = por %p98, %p99
      %p101 = scmp.ne.s32.totalorder %s89, %s90
      %p102 = scmp.eq.s32.totalorder %s17, 1
      %p103 = por %p101, %p102
      %p105 = scmp.ne.s32.totalorder %s90, %s104
      %p106 = scmp.eq.s32.totalorder %s17, 0
      %p107 = por %p105, %p106
      %s109 = sadd.s32 %s108, 1
      %p112 = scmp.eq.s32.totalorder %s11, 1
      %p113 = scmp.ne.s32.totalorder %s108, %s110
      %p114 = scmp.eq.s32.totalorder %s11, 0
      %p115 = por %p113, %p114
      %p116 = scmp.ne.s32.totalorder %s108, %s110
      %p117 = scmp.eq.s32.totalorder %s16, 1
      %p118 = por %p116, %p117
      %p119 = scmp.ne.s32.totalorder %s110, %s111
      %p120 = scmp.eq.s32.totalorder %s16, 0
      %p121 = por %p119, %p120
      %p122 = scmp.ne.s32.totalorder %s110, %s111
      %p123 = scmp.eq.s32.totalorder %s17, 1
      %p124 = por %p122, %p123
      %p126 = scmp.ne.s32.totalorder %s111, %s125
      %p127 = scmp.eq.s32.totalorder %s17, 0
      %p128 = por %p126, %p127
      %s129 = ssub.s32 %s11, %s18
      %p130 = scmp.eq.s32.totalorder %s129, 0
      %s132 = sadd.s32 %s131, 1
      %s133 = scalar_select %p130, %s131, %s132
      %p136 = pneg %p130
      %p137 = scmp.eq.s32.totalorder %s11, 1
      %p138 = por %p136, %p137
      %p139 = scmp.ne.s32.totalorder %s131, %s134
      %p140 = scmp.eq.s32.totalorder %s11, 0
      %p141 = por %p139, %p140
      %p142 = scmp.ne.s32.totalorder %s131, %s134
      %p143 = scmp.eq.s32.totalorder %s16, 1
      %p144 = por %p142, %p143
      %p145 = scmp.ne.s32.totalorder %s134, %s135
      %p146 = scmp.eq.s32.totalorder %s16, 0
      %p147 = por %p145, %p146
      %p148 = scmp.ne.s32.totalorder %s134, %s135
      %p149 = scmp.eq.s32.totalorder %s17, 1
      %p150 = por %p148, %p149
      %p152 = scmp.ne.s32.totalorder %s135, %s151
      %p153 = scmp.eq.s32.totalorder %s17, 0
      %p154 = por %p152, %p153
      %p155 = scmp.le.s32.totalorder 1, %s11
      %p156 = scmp.lt.s32.totalorder %s11, 3
      %p157 = pnand %p155, %p156
      %p158 = pneg %p157
      // Predicated region
      $region9: #{tpu_custom_call.1} parent=5 // pred_check
        _
      $region10: #{tpu_custom_call.1} parent=5 // pred_check_branch
        %160 = sbr.rel (%p157) target = $region12
      $region11: #{tpu_custom_call.1} parent=5 // pred_region
        %s161 = ssub.s32 %s11, 1
        // Predicated region
        $region13: #{tpu_custom_call.1} parent=11 // pred_check
          %p162 = pneg %p58
        $region14: #{tpu_custom_call.1} parent=11 // pred_check_branch
          %164 = sbr.rel (%p162) target = $region16
        $region15: #{tpu_custom_call.1} parent=11 // pred_region
          _
        $region16: #{tpu_custom_call.1} parent=11 // pred_fallthru
          _
        // Predicated region
        $region17: #{tpu_custom_call.1} parent=11 // pred_check
          %p165 = pneg %p79
        $region18: #{tpu_custom_call.1} parent=11 // pred_check_branch
          %167 = sbr.rel (%p165) target = $region20
        $region19: #{tpu_custom_call.1} parent=11 // pred_region
          _
        $region20: #{tpu_custom_call.1} parent=11 // pred_fallthru
          _
        // Predicated region
        $region21: #{tpu_custom_call.1} parent=11 // pred_check
          %p168 = pneg %p100
        $region22: #{tpu_custom_call.1} parent=11 // pred_check_branch
          %170 = sbr.rel (%p168) target = $region24
        $region23: #{tpu_custom_call.1} parent=11 // pred_region
          _
        $region24: #{tpu_custom_call.1} parent=11 // pred_fallthru
          _
        // Predicated region
        $region25: #{tpu_custom_call.1} parent=11 // pred_check
          %p171 = pneg %p121
        $region26: #{tpu_custom_call.1} parent=11 // pred_check_branch
          %173 = sbr.rel (%p171) target = $region28
        $region27: #{tpu_custom_call.1} parent=11 // pred_region
          _
        $region28: #{tpu_custom_call.1} parent=11 // pred_fallthru
          _
      $region12: #{tpu_custom_call.1} parent=5 // pred_fallthru
        _
      %p174 = scmp.lt.s32.totalorder %s11, 2
      // Predicated region
      $region29: #{tpu_custom_call.1} parent=5 // pred_check
        %p175 = pneg %p174
      $region30: #{tpu_custom_call.1} parent=5 // pred_check_branch
        %177 = sbr.rel (%p175) target = $region32
      $region31: #{tpu_custom_call.1} parent=5 // pred_region
        // Predicated region
        $region33: #{tpu_custom_call.1} parent=31 // pred_check
          %p178 = pneg %p31
        $region34: #{tpu_custom_call.1} parent=31 // pred_check_branch
          %180 = sbr.rel (%p178) target = $region36
        $region35: #{tpu_custom_call.1} parent=31 // pred_region
          %s181 = smul.u32 32, %s11
          %s182 = ssub.s32 63, %s181
          %p183 = scmp.lt.s32.totalorder %s182, 32
          %s184 = scalar_select %p183, %s182, 32
          %s185 = smul.u32 8, %s184
          %p186 = scmp.lt.s32.totalorder %s181, 62
          %s187 = scalar_select %p186, %s181, 62
          %s188 = smul.addr %s187, 8
          %s189 = scalar_lea.vmem %s0, %s188
          %s190 = smul.u32 32, %s11
          %s191 = ssub.s32 63, %s190
          %p192 = scmp.lt.s32.totalorder %s191, 32
          %s193 = scalar_select %p192, %s191, 32
          %s194 = smul.u32 8, %s193
        $region36: #{tpu_custom_call.1} parent=31 // pred_fallthru
          _
      $region32: #{tpu_custom_call.1} parent=5 // pred_fallthru
        _
      %p195 = scmp.le.s32.totalorder 1, %s11
      %p196 = scmp.lt.s32.totalorder %s11, 3
      %p197 = pnand %p195, %p196
      %p198 = pneg %p197
      // Predicated region
      $region37: #{tpu_custom_call.1} parent=5 // pred_check
        _
      $region38: #{tpu_custom_call.1} parent=5 // pred_check_branch
        %200 = sbr.rel (%p197) target = $region40
      $region39: #{tpu_custom_call.1} parent=5 // pred_region
        %s201 = ssub.s32 %s11, 1
        %s202 = smul.u32 32, %s16
        %s203 = ssub.s32 63, %s202
        %p204 = scmp.lt.s32.totalorder %s203, 32
        %s205 = scalar_select %p204, %s203, 32
        %s206 = smul.u32 8, %s205
        %p207 = scmp.lt.s32.totalorder %s202, 62
        %s208 = scalar_select %p207, %s202, 62
        %s209 = smul.addr %s208, 8
        %s210 = scalar_lea.vmem %s0, %s209
        %p211 = pneg %p37
        %p212 = pneg %p34
        %p213 = pneg %p58
        %p214 = pneg %p55
        %p215 = pneg %p79
        %p216 = pneg %p76
        %p217 = pneg %p100
        %p218 = pneg %p97
        %p219 = pneg %p121
        %p220 = pneg %p118
        %p221 = pneg %p147
        %p222 = pneg %p144
        %s223 = sand.u32 %s134, 1
        %s224 = sand.u32 %s134, 1
        %s225 = smul.addr %s224, 256
        %s226 = scalar_lea.vmem [#allocation2], %s225
        %s227 = smul.u32 32, %s16
        %s228 = ssub.s32 63, %s227
        %p229 = scmp.lt.s32.totalorder %s228, 32
        %s230 = scalar_select %p229, %s228, 32
        %s231 = smul.u32 8, %s230
        %p232 = scmp.lt.s32.totalorder %s227, 62
        %s233 = scalar_select %p232, %s227, 62
        %s234 = smul.addr %s233, 8
        %s235 = scalar_lea.vmem %s0, %s234
        %s236 = smul.u32 32, %s16
        %s237 = ssub.s32 63, %s236
        %p238 = scmp.lt.s32.totalorder %s237, 32
        %s239 = scalar_select %p238, %s237, 32
        %s240 = smul.u32 8, %s239
        %s241 = smul.u32 32, %s16
        %s242 = ssub.s32 63, %s241
        %p243 = scmp.lt.s32.totalorder %s242, 32
        %s244 = scalar_select %p243, %s242, 32
        %s245 = smul.u32 8, %s244
        %v247 = vld [vmem:[%s235] sm:$0xff]
        %v248 = vld [vmem:[%s235 + $0x8] sm:$0xff]
        %v249 = vld [vmem:[%s235 + $0x10] sm:$0xff]
        %v250 = vld [vmem:[%s235 + $0x18] sm:$0xff]
        %v251 = vld [vmem:[%s235 + $0x20] sm:$0xff]
        %v252 = vld [vmem:[%s235 + $0x28] sm:$0xff]
        %v253 = vld [vmem:[%s235 + $0x30] sm:$0xff]
        %v254 = vld [vmem:[%s235 + $0x38] sm:$0xff]
        %v255 = vld [vmem:[%s235 + $0x40] sm:$0xff]
        %v256 = vld [vmem:[%s235 + $0x48] sm:$0xff]
        %v257 = vld [vmem:[%s235 + $0x50] sm:$0xff]
        %v258 = vld [vmem:[%s235 + $0x58] sm:$0xff]
        %v259 = vld [vmem:[%s235 + $0x60] sm:$0xff]
        %v260 = vld [vmem:[%s235 + $0x68] sm:$0xff]
        %v261 = vld [vmem:[%s235 + $0x70] sm:$0xff]
        %v262 = vld [vmem:[%s235 + $0x78] sm:$0xff]
        %v263 = vld [vmem:[%s235 + $0x80] sm:$0xff]
        %v264 = vld [vmem:[%s235 + $0x88] sm:$0xff]
        %v265 = vld [vmem:[%s235 + $0x90] sm:$0xff]
        %v266 = vld [vmem:[%s235 + $0x98] sm:$0xff]
        %v267 = vld [vmem:[%s235 + $0xa0] sm:$0xff]
        %v268 = vld [vmem:[%s235 + $0xa8] sm:$0xff]
        %v269 = vld [vmem:[%s235 + $0xb0] sm:$0xff]
        %v270 = vld [vmem:[%s235 + $0xb8] sm:$0xff]
        %v271 = vld [vmem:[%s235 + $0xc0] sm:$0xff]
        %v272 = vld [vmem:[%s235 + $0xc8] sm:$0xff]
        %v273 = vld [vmem:[%s235 + $0xd0] sm:$0xff]
        %v274 = vld [vmem:[%s235 + $0xd8] sm:$0xff]
        %v275 = vld [vmem:[%s235 + $0xe0] sm:$0xff]
        %v276 = vld [vmem:[%s235 + $0xe8] sm:$0xff]
        %v277 = vld [vmem:[%s235 + $0xf0] sm:$0xff]
        %v278 = vld [vmem:[%s235 + $0xf8] sm:$0xff]
        %v279 = vpack.c.bf16 %v248, %v247
        %v280 = vpack.c.bf16 %v250, %v249
        %v281 = vpack.c.bf16 %v252, %v251
        %v282 = vpack.c.bf16 %v254, %v253
        %v283 = vpack.c.bf16 %v256, %v255
        %v284 = vpack.c.bf16 %v258, %v257
        %v285 = vpack.c.bf16 %v260, %v259
        %v286 = vpack.c.bf16 %v262, %v261
        %v287 = vpack.c.bf16 %v264, %v263
        %v288 = vpack.c.bf16 %v266, %v265
        %v289 = vpack.c.bf16 %v268, %v267
        %v290 = vpack.c.bf16 %v270, %v269
        %v291 = vpack.c.bf16 %v272, %v271
        %v292 = vpack.c.bf16 %v274, %v273
        %v293 = vpack.c.bf16 %v276, %v275
        %v294 = vpack.c.bf16 %v278, %v277
        %v295 = vld [vmem:[%s1] sm:$0xf]
        %v296 = vld [vmem:[%s1 + $0x4] sm:$0xf]
        %v297 = vld [vmem:[%s1 + $0x8] sm:$0xf]
        %v298 = vld [vmem:[%s1 + $0xc] sm:$0xf]
        %v299 = vld [vmem:[%s2] sm:$0x1]
        %v301 = vperm.slane %v299, 0
        %v307 = vunpack.c.l.b16 %v295
        %v308 = vunpack.c.l.b16 %v296
        %v309 = vunpack.c.l.b16 %v297
        %v310 = vunpack.c.l.b16 %v298
        %v311 = vpack.c.b16 %v308, %v307
        %v312 = vpack.c.b16 %v310, %v309
        %vm315 = vcmask 261120
        %v317 = vsel %vm315, %v279, 0
        %v320 = vsel %vm315, %v280, 0
        %v323 = vsel %vm315, %v281, 0
        %v326 = vsel %vm315, %v282, 0
        %v329 = vsel %vm315, %v283, 0
        %v332 = vsel %vm315, %v284, 0
        %v335 = vsel %vm315, %v285, 0
        %v338 = vsel %vm315, %v286, 0
        %v341 = vsel %vm315, %v287, 0
        %v344 = vsel %vm315, %v288, 0
        %v347 = vsel %vm315, %v289, 0
        %v350 = vsel %vm315, %v290, 0
        %v353 = vsel %vm315, %v291, 0
        %v356 = vsel %vm315, %v292, 0
        %v359 = vsel %vm315, %v293, 0
        %v362 = vsel %vm315, %v294, 0
        %364 = vmatpush.bf16.msra.mxu0 0
        %365 = vmatpush.bf16.msra.mxu0 0
        %366 = vmatpush.bf16.msra.mxu0 0
        %367 = vmatpush.bf16.msra.mxu0 0
        %368 = vmatpush.bf16.msra.mxu0 0
        %369 = vmatpush.bf16.msra.mxu0 0
        %370 = vmatpush.bf16.msra.mxu0 %v312
        %371 = vmatpush.bf16.msra.mxu0 %v311
        %372 = vmatmul.bf16.gmra.mxu0 %v317
        %v373 = vpop.f32.mrf.mxu0
        %v374 = vadd.f32 %v301, %v373
        %v375 = vpop.f32.mrf.mxu0
        %v376 = vadd.f32 %v301, %v375
        %377 = vmatmul.bf16.gmra.mxu0 %v320
        %v378 = vpop.f32.mrf.mxu0
        %v379 = vadd.f32 %v301, %v378
        %v380 = vpop.f32.mrf.mxu0
        %v381 = vadd.f32 %v301, %v380
        %382 = vmatmul.bf16.gmra.mxu0 %v323
        %v383 = vpop.f32.mrf.mxu0
        %v384 = vadd.f32 %v301, %v383
        %v385 = vpop.f32.mrf.mxu0
        %v386 = vadd.f32 %v301, %v385
        %387 = vmatmul.bf16.gmra.mxu0 %v326
        %v388 = vpop.f32.mrf.mxu0
        %v389 = vadd.f32 %v301, %v388
        %v390 = vpop.f32.mrf.mxu0
        %v391 = vadd.f32 %v301, %v390
        %392 = vmatmul.bf16.gmra.mxu0 %v329
        %v393 = vpop.f32.mrf.mxu0
        %v394 = vadd.f32 %v301, %v393
        %v395 = vpop.f32.mrf.mxu0
        %v396 = vadd.f32 %v301, %v395
        %397 = vmatmul.bf16.gmra.mxu0 %v332
        %v398 = vpop.f32.mrf.mxu0
        %v399 = vadd.f32 %v301, %v398
        %v400 = vpop.f32.mrf.mxu0
        %v401 = vadd.f32 %v301, %v400
        %402 = vmatmul.bf16.gmra.mxu0 %v335
        %v403 = vpop.f32.mrf.mxu0
        %v404 = vadd.f32 %v301, %v403
        %v405 = vpop.f32.mrf.mxu0
        %v406 = vadd.f32 %v301, %v405
        %407 = vmatmul.bf16.gmra.mxu0 %v338
        %v408 = vpop.f32.mrf.mxu0
        %v409 = vadd.f32 %v301, %v408
        %v410 = vpop.f32.mrf.mxu0
        %v411 = vadd.f32 %v301, %v410
        %412 = vmatmul.bf16.gmra.mxu0 %v341
        %v413 = vpop.f32.mrf.mxu0
        %v414 = vadd.f32 %v301, %v413
        %v415 = vpop.f32.mrf.mxu0
        %v416 = vadd.f32 %v301, %v415
        %417 = vmatmul.bf16.gmra.mxu0 %v344
        %v418 = vpop.f32.mrf.mxu0
        %v419 = vadd.f32 %v301, %v418
        %v420 = vpop.f32.mrf.mxu0
        %v421 = vadd.f32 %v301, %v420
        %422 = vmatmul.bf16.gmra.mxu0 %v347
        %v423 = vpop.f32.mrf.mxu0
        %v424 = vadd.f32 %v301, %v423
        %v425 = vpop.f32.mrf.mxu0
        %v426 = vadd.f32 %v301, %v425
        %427 = vmatmul.bf16.gmra.mxu0 %v350
        %v428 = vpop.f32.mrf.mxu0
        %v429 = vadd.f32 %v301, %v428
        %v430 = vpop.f32.mrf.mxu0
        %v431 = vadd.f32 %v301, %v430
        %432 = vmatmul.bf16.gmra.mxu0 %v353
        %v433 = vpop.f32.mrf.mxu0
        %v434 = vadd.f32 %v301, %v433
        %v435 = vpop.f32.mrf.mxu0
        %v436 = vadd.f32 %v301, %v435
        %437 = vmatmul.bf16.gmra.mxu0 %v356
        %v438 = vpop.f32.mrf.mxu0
        %v439 = vadd.f32 %v301, %v438
        %v440 = vpop.f32.mrf.mxu0
        %v441 = vadd.f32 %v301, %v440
        %442 = vmatmul.bf16.gmra.mxu0 %v359
        %v443 = vpop.f32.mrf.mxu0
        %v444 = vadd.f32 %v301, %v443
        %v445 = vpop.f32.mrf.mxu0
        %v446 = vadd.f32 %v301, %v445
        %447 = vmatmul.bf16.gmra.mxu0 %v362
        %v448 = vpop.f32.mrf.mxu0
        %v449 = vadd.f32 %v301, %v448
        %v450 = vpop.f32.mrf.mxu0
        %v451 = vadd.f32 %v301, %v450
        %452 = vdwg.mxu0
        %v453 = vmax.f32 %v374, 0.0
        %v454 = vmax.f32 %v376, 0.0
        %v455 = vmax.f32 %v379, 0.0
        %v456 = vmax.f32 %v381, 0.0
        %v457 = vmax.f32 %v384, 0.0
        %v458 = vmax.f32 %v386, 0.0
        %v459 = vmax.f32 %v389, 0.0
        %v460 = vmax.f32 %v391, 0.0
        %v461 = vmax.f32 %v394, 0.0
        %v462 = vmax.f32 %v396, 0.0
        %v463 = vmax.f32 %v399, 0.0
        %v464 = vmax.f32 %v401, 0.0
        %v465 = vmax.f32 %v404, 0.0
        %v466 = vmax.f32 %v406, 0.0
        %v467 = vmax.f32 %v409, 0.0
        %v468 = vmax.f32 %v411, 0.0
        %v469 = vmax.f32 %v414, 0.0
        %v470 = vmax.f32 %v416, 0.0
        %v471 = vmax.f32 %v419, 0.0
        %v472 = vmax.f32 %v421, 0.0
        %v473 = vmax.f32 %v424, 0.0
        %v474 = vmax.f32 %v426, 0.0
        %v475 = vmax.f32 %v429, 0.0
        %v476 = vmax.f32 %v431, 0.0
        %v477 = vmax.f32 %v434, 0.0
        %v478 = vmax.f32 %v436, 0.0
        %v479 = vmax.f32 %v439, 0.0
        %v480 = vmax.f32 %v441, 0.0
        %v481 = vmax.f32 %v444, 0.0
        %v482 = vmax.f32 %v446, 0.0
        %v483 = vmax.f32 %v449, 0.0
        %v484 = vmax.f32 %v451, 0.0
        %v485 = vpack.c.bf16 %v454, %v453
        %v486 = vpack.c.bf16 %v456, %v455
        %v487 = vpack.c.bf16 %v458, %v457
        %v488 = vpack.c.bf16 %v460, %v459
        %v489 = vpack.c.bf16 %v462, %v461
        %v490 = vpack.c.bf16 %v464, %v463
        %v491 = vpack.c.bf16 %v466, %v465
        %v492 = vpack.c.bf16 %v468, %v467
        %v493 = vpack.c.bf16 %v470, %v469
        %v494 = vpack.c.bf16 %v472, %v471
        %v495 = vpack.c.bf16 %v474, %v473
        %v496 = vpack.c.bf16 %v476, %v475
        %v497 = vpack.c.bf16 %v478, %v477
        %v498 = vpack.c.bf16 %v480, %v479
        %v499 = vpack.c.bf16 %v482, %v481
        %v500 = vpack.c.bf16 %v484, %v483
        %v501 = vld [vmem:[%s3] sm:$0xf]
        %v502 = vld [vmem:[%s3 + $0x4] sm:$0xf]
        %v503 = vld [vmem:[%s3 + $0x8] sm:$0xf]
        %v504 = vld [vmem:[%s3 + $0xc] sm:$0xf]
        %v505 = vld [vmem:[%s3 + $0x10] sm:$0xf]
        %v506 = vld [vmem:[%s3 + $0x14] sm:$0xf]
        %v507 = vld [vmem:[%s3 + $0x18] sm:$0xf]
        %v508 = vld [vmem:[%s3 + $0x1c] sm:$0xf]
        %v509 = vld [vmem:[%s3 + $0x20] sm:$0xf]
        %v510 = vld [vmem:[%s3 + $0x24] sm:$0xf]
        %v511 = vld [vmem:[%s3 + $0x28] sm:$0xf]
        %v512 = vld [vmem:[%s3 + $0x2c] sm:$0xf]
        %v513 = vld [vmem:[%s3 + $0x30] sm:$0xf]
        %v514 = vld [vmem:[%s3 + $0x34] sm:$0xf]
        %v515 = vld [vmem:[%s3 + $0x38] sm:$0xf]
        %v516 = vld [vmem:[%s3 + $0x3c] sm:$0xf]
        %v517 = vld [vmem:[%s4] sm:$0x1]
        %v519 = vperm.slane %v517, 0
        %v537 = vunpack.c.l.b16 %v501
        %v538 = vunpack.c.l.b16 %v502
        %v539 = vunpack.c.l.b16 %v503
        %v540 = vunpack.c.l.b16 %v504
        %v541 = vunpack.c.l.b16 %v505
        %v542 = vunpack.c.l.b16 %v506
        %v543 = vunpack.c.l.b16 %v507
        %v544 = vunpack.c.l.b16 %v508
        %v545 = vunpack.c.l.b16 %v509
        %v546 = vunpack.c.l.b16 %v510
        %v547 = vunpack.c.l.b16 %v511
        %v548 = vunpack.c.l.b16 %v512
        %v549 = vunpack.c.l.b16 %v513
        %v550 = vunpack.c.l.b16 %v514
        %v551 = vunpack.c.l.b16 %v515
        %v552 = vunpack.c.l.b16 %v516
        %v553 = vpack.c.b16 %v538, %v537
        %v554 = vpack.c.b16 %v540, %v539
        %v555 = vpack.c.b16 %v542, %v541
        %v556 = vpack.c.b16 %v544, %v543
        %v557 = vpack.c.b16 %v546, %v545
        %v558 = vpack.c.b16 %v548, %v547
        %v559 = vpack.c.b16 %v550, %v549
        %v560 = vpack.c.b16 %v552, %v551
        %569 = vmatpush.bf16.msra.mxu0 %v560
        %570 = vmatpush.bf16.msra.mxu0 %v559
        %571 = vmatpush.bf16.msra.mxu0 %v558
        %572 = vmatpush.bf16.msra.mxu0 %v557
        %573 = vmatpush.bf16.msra.mxu0 %v556
        %574 = vmatpush.bf16.msra.mxu0 %v555
        %575 = vmatpush.bf16.msra.mxu0 %v554
        %576 = vmatpush.bf16.msra.mxu0 %v553
        %577 = vmatmul.bf16.gmra.mxu0 %v485
        %v578 = vpop.f32.mrf.mxu0
        %v579 = vadd.f32 %v519, %v578
        %v580 = vpop.f32.mrf.mxu0
        %v581 = vadd.f32 %v519, %v580
        %582 = vmatmul.bf16.gmra.mxu0 %v486
        %v583 = vpop.f32.mrf.mxu0
        %v584 = vadd.f32 %v519, %v583
        %v585 = vpop.f32.mrf.mxu0
        %v586 = vadd.f32 %v519, %v585
        %587 = vmatmul.bf16.gmra.mxu0 %v487
        %v588 = vpop.f32.mrf.mxu0
        %v589 = vadd.f32 %v519, %v588
        %v590 = vpop.f32.mrf.mxu0
        %v591 = vadd.f32 %v519, %v590
        %592 = vmatmul.bf16.gmra.mxu0 %v488
        %v593 = vpop.f32.mrf.mxu0
        %v594 = vadd.f32 %v519, %v593
        %v595 = vpop.f32.mrf.mxu0
        %v596 = vadd.f32 %v519, %v595
        %597 = vmatmul.bf16.gmra.mxu0 %v489
        %v598 = vpop.f32.mrf.mxu0
        %v599 = vadd.f32 %v519, %v598
        %v600 = vpop.f32.mrf.mxu0
        %v601 = vadd.f32 %v519, %v600
        %602 = vmatmul.bf16.gmra.mxu0 %v490
        %v603 = vpop.f32.mrf.mxu0
        %v604 = vadd.f32 %v519, %v603
        %v605 = vpop.f32.mrf.mxu0
        %v606 = vadd.f32 %v519, %v605
        %607 = vmatmul.bf16.gmra.mxu0 %v491
        %v608 = vpop.f32.mrf.mxu0
        %v609 = vadd.f32 %v519, %v608
        %v610 = vpop.f32.mrf.mxu0
        %v611 = vadd.f32 %v519, %v610
        %612 = vmatmul.bf16.gmra.mxu0 %v492
        %v613 = vpop.f32.mrf.mxu0
        %v614 = vadd.f32 %v519, %v613
        %v615 = vpop.f32.mrf.mxu0
        %v616 = vadd.f32 %v519, %v615
        %617 = vmatmul.bf16.gmra.mxu0 %v493
        %v618 = vpop.f32.mrf.mxu0
        %v619 = vadd.f32 %v519, %v618
        %v620 = vpop.f32.mrf.mxu0
        %v621 = vadd.f32 %v519, %v620
        %622 = vmatmul.bf16.gmra.mxu0 %v494
        %v623 = vpop.f32.mrf.mxu0
        %v624 = vadd.f32 %v519, %v623
        %v625 = vpop.f32.mrf.mxu0
        %v626 = vadd.f32 %v519, %v625
        %627 = vmatmul.bf16.gmra.mxu0 %v495
        %v628 = vpop.f32.mrf.mxu0
        %v629 = vadd.f32 %v519, %v628
        %v630 = vpop.f32.mrf.mxu0
        %v631 = vadd.f32 %v519, %v630
        %632 = vmatmul.bf16.gmra.mxu0 %v496
        %v633 = vpop.f32.mrf.mxu0
        %v634 = vadd.f32 %v519, %v633
        %v635 = vpop.f32.mrf.mxu0
        %v636 = vadd.f32 %v519, %v635
        %637 = vmatmul.bf16.gmra.mxu0 %v497
        %v638 = vpop.f32.mrf.mxu0
        %v639 = vadd.f32 %v519, %v638
        %v640 = vpop.f32.mrf.mxu0
        %v641 = vadd.f32 %v519, %v640
        %642 = vmatmul.bf16.gmra.mxu0 %v498
        %v643 = vpop.f32.mrf.mxu0
        %v644 = vadd.f32 %v519, %v643
        %v645 = vpop.f32.mrf.mxu0
        %v646 = vadd.f32 %v519, %v645
        %647 = vmatmul.bf16.gmra.mxu0 %v499
        %v648 = vpop.f32.mrf.mxu0
        %v649 = vadd.f32 %v519, %v648
        %v650 = vpop.f32.mrf.mxu0
        %v651 = vadd.f32 %v519, %v650
        %652 = vmatmul.bf16.gmra.mxu0 %v500
        %v653 = vpop.f32.mrf.mxu0
        %v654 = vadd.f32 %v519, %v653
        %v655 = vpop.f32.mrf.mxu0
        %v656 = vadd.f32 %v519, %v655
        %657 = vdwg.mxu0
        %vm658 = vcmask 80896
        %659 = vst.msk [vmem:[%s226] sm:$0xff] %vm658, %v579
        %660 = vst.msk [vmem:[%s226 + $0x8] sm:$0xff] %vm658, %v581
        %661 = vst.msk [vmem:[%s226 + $0x10] sm:$0xff] %vm658, %v584
        %662 = vst.msk [vmem:[%s226 + $0x18] sm:$0xff] %vm658, %v586
        %663 = vst.msk [vmem:[%s226 + $0x20] sm:$0xff] %vm658, %v589
        %664 = vst.msk [vmem:[%s226 + $0x28] sm:$0xff] %vm658, %v591
        %665 = vst.msk [vmem:[%s226 + $0x30] sm:$0xff] %vm658, %v594
        %666 = vst.msk [vmem:[%s226 + $0x38] sm:$0xff] %vm658, %v596
        %667 = vst.msk [vmem:[%s226 + $0x40] sm:$0xff] %vm658, %v599
        %668 = vst.msk [vmem:[%s226 + $0x48] sm:$0xff] %vm658, %v601
        %669 = vst.msk [vmem:[%s226 + $0x50] sm:$0xff] %vm658, %v604
        %670 = vst.msk [vmem:[%s226 + $0x58] sm:$0xff] %vm658, %v606
        %671 = vst.msk [vmem:[%s226 + $0x60] sm:$0xff] %vm658, %v609
        %672 = vst.msk [vmem:[%s226 + $0x68] sm:$0xff] %vm658, %v611
        %673 = vst.msk [vmem:[%s226 + $0x70] sm:$0xff] %vm658, %v614
        %674 = vst.msk [vmem:[%s226 + $0x78] sm:$0xff] %vm658, %v616
        %675 = vst.msk [vmem:[%s226 + $0x80] sm:$0xff] %vm658, %v619
        %676 = vst.msk [vmem:[%s226 + $0x88] sm:$0xff] %vm658, %v621
        %677 = vst.msk [vmem:[%s226 + $0x90] sm:$0xff] %vm658, %v624
        %678 = vst.msk [vmem:[%s226 + $0x98] sm:$0xff] %vm658, %v626
        %679 = vst.msk [vmem:[%s226 + $0xa0] sm:$0xff] %vm658, %v629
        %680 = vst.msk [vmem:[%s226 + $0xa8] sm:$0xff] %vm658, %v631
        %681 = vst.msk [vmem:[%s226 + $0xb0] sm:$0xff] %vm658, %v634
        %682 = vst.msk [vmem:[%s226 + $0xb8] sm:$0xff] %vm658, %v636
        %683 = vst.msk [vmem:[%s226 + $0xc0] sm:$0xff] %vm658, %v639
        %684 = vst.msk [vmem:[%s226 + $0xc8] sm:$0xff] %vm658, %v641
        %685 = vst.msk [vmem:[%s226 + $0xd0] sm:$0xff] %vm658, %v644
        %686 = vst.msk [vmem:[%s226 + $0xd8] sm:$0xff] %vm658, %v646
        %687 = vst.msk [vmem:[%s226 + $0xe0] sm:$0xff] %vm658, %v649
        %688 = vst.msk [vmem:[%s226 + $0xe8] sm:$0xff] %vm658, %v651
        %689 = vst.msk [vmem:[%s226 + $0xf0] sm:$0xff] %vm658, %v654
        %690 = vst.msk [vmem:[%s226 + $0xf8] sm:$0xff] %vm658, %v656
        %s691 = sand.u32 %s134, 1
        %s692 = sand.u32 %s134, 1
        %s693 = smul.addr %s692, 256
        %s694 = scalar_lea.vmem [#allocation2], %s693
        // Predicated region
        $region41: #{tpu_custom_call.1} parent=39 // pred_check
          %p695 = pneg %p144
        $region42: #{tpu_custom_call.1} parent=39 // pred_check_branch
          %697 = sbr.rel (%p695) target = $region44
        $region43: #{tpu_custom_call.1} parent=39 // pred_region
          %s698 = smul.u32 32, %s16
          %s699 = ssub.s32 63, %s698
          %p700 = scmp.lt.s32.totalorder %s699, 32
          %s701 = scalar_select %p700, %s699, 32
          %s702 = smul.u32 8, %s701
          %p703 = scmp.ne.s32.totalorder 0, %s702
          %s704 = smul.addr %s698, 8
          %s705 = scalar_lea.vmem %s5, %s704
          // Predicated region
          $region45: #{tpu_custom_call.1} parent=43 // pred_check
            %p706 = pneg %p703
          $region46: #{tpu_custom_call.1} parent=43 // pred_check_branch
            %708 = sbr.rel (%p706) target = $region48
          $region47: #{tpu_custom_call.1} parent=43 // pred_region
            // Predicated region
            $region49: #{tpu_custom_call.1} parent=47 // pred_check
              _
            $region50: #{tpu_custom_call.1} parent=47 // pred_check_branch
              %710 = sbr.rel (0) target = $region52
            $region51: #{tpu_custom_call.1} parent=47 // pred_region
              // Predicated region
              $region71: #{tpu_custom_call.1} parent=51 // pred_check
                _
              $region72: #{tpu_custom_call.1} parent=51 // pred_check_branch
                %822 = sbr.rel (0) target = $region74
              $region73: #{tpu_custom_call.1} parent=51 // pred_region
                %s823 = sshrl.u32 %s701, 5
                // While loop
                $region75: #{tpu_custom_call.1} parent=73 // loop_pre_header
                  _
                $region76: #{tpu_custom_call.1} parent=73 // loop_header
                  %s825 = sphi 0, %s827
                  %p826 = scmp.ge.s32.totalorder %s825, %s823
                  %s830 = sphi 0, %s899
                  %s831 = sphi %s694, %s902
                  %s832 = sphi %s705, %s903
                $region77: #{tpu_custom_call.1} parent=73 // loop_header_branch
                  %829 = sbr.rel (%p826) target = $region81
                $region78: #{tpu_custom_call.1} parent=73 // loop_body
                  %v833 = vld [vmem:[%s831] sm:$0xff]
                  %834 = vst [vmem:[%s832] sm:$0xff] %v833
                  %v835 = vld [vmem:[%s831 + $0x8] sm:$0xff]
                  %836 = vst [vmem:[%s832 + $0x8] sm:$0xff] %v835
                  %v837 = vld [vmem:[%s831 + $0x10] sm:$0xff]
                  %838 = vst [vmem:[%s832 + $0x10] sm:$0xff] %v837
                  %v839 = vld [vmem:[%s831 + $0x18] sm:$0xff]
                  %840 = vst [vmem:[%s832 + $0x18] sm:$0xff] %v839
                  %v841 = vld [vmem:[%s831 + $0x20] sm:$0xff]
                  %842 = vst [vmem:[%s832 + $0x20] sm:$0xff] %v841
                  %v843 = vld [vmem:[%s831 + $0x28] sm:$0xff]
                  %844 = vst [vmem:[%s832 + $0x28] sm:$0xff] %v843
                  %v845 = vld [vmem:[%s831 + $0x30] sm:$0xff]
                  %846 = vst [vmem:[%s832 + $0x30] sm:$0xff] %v845
                  %v847 = vld [vmem:[%s831 + $0x38] sm:$0xff]
                  %848 = vst [vmem:[%s832 + $0x38] sm:$0xff] %v847
                  %v849 = vld [vmem:[%s831 + $0x40] sm:$0xff]
                  %850 = vst [vmem:[%s832 + $0x40] sm:$0xff] %v849
                  %v851 = vld [vmem:[%s831 + $0x48] sm:$0xff]
                  %852 = vst [vmem:[%s832 + $0x48] sm:$0xff] %v851
                  %v853 = vld [vmem:[%s831 + $0x50] sm:$0xff]
                  %854 = vst [vmem:[%s832 + $0x50] sm:$0xff] %v853
                  %v855 = vld [vmem:[%s831 + $0x58] sm:$0xff]
                  %856 = vst [vmem:[%s832 + $0x58] sm:$0xff] %v855
                  %v857 = vld [vmem:[%s831 + $0x60] sm:$0xff]
                  %858 = vst [vmem:[%s832 + $0x60] sm:$0xff] %v857
                  %v859 = vld [vmem:[%s831 + $0x68] sm:$0xff]
                  %860 = vst [vmem:[%s832 + $0x68] sm:$0xff] %v859
                  %v861 = vld [vmem:[%s831 + $0x70] sm:$0xff]
                  %862 = vst [vmem:[%s832 + $0x70] sm:$0xff] %v861
                  %v863 = vld [vmem:[%s831 + $0x78] sm:$0xff]
                  %864 = vst [vmem:[%s832 + $0x78] sm:$0xff] %v863
                  %v865 = vld [vmem:[%s831 + $0x80] sm:$0xff]
                  %866 = vst [vmem:[%s832 + $0x80] sm:$0xff] %v865
                  %v867 = vld [vmem:[%s831 + $0x88] sm:$0xff]
                  %868 = vst [vmem:[%s832 + $0x88] sm:$0xff] %v867
                  %v869 = vld [vmem:[%s831 + $0x90] sm:$0xff]
                  %870 = vst [vmem:[%s832 + $0x90] sm:$0xff] %v869
                  %v871 = vld [vmem:[%s831 + $0x98] sm:$0xff]
                  %872 = vst [vmem:[%s832 + $0x98] sm:$0xff] %v871
                  %v873 = vld [vmem:[%s831 + $0xa0] sm:$0xff]
                  %874 = vst [vmem:[%s832 + $0xa0] sm:$0xff] %v873
                  %v875 = vld [vmem:[%s831 + $0xa8] sm:$0xff]
                  %876 = vst [vmem:[%s832 + $0xa8] sm:$0xff] %v875
                  %v877 = vld [vmem:[%s831 + $0xb0] sm:$0xff]
                  %878 = vst [vmem:[%s832 + $0xb0] sm:$0xff] %v877
                  %v879 = vld [vmem:[%s831 + $0xb8] sm:$0xff]
                  %880 = vst [vmem:[%s832 + $0xb8] sm:$0xff] %v879
                  %v881 = vld [vmem:[%s831 + $0xc0] sm:$0xff]
                  %882 = vst [vmem:[%s832 + $0xc0] sm:$0xff] %v881
                  %v883 = vld [vmem:[%s831 + $0xc8] sm:$0xff]
                  %884 = vst [vmem:[%s832 + $0xc8] sm:$0xff] %v883
                  %v885 = vld [vmem:[%s831 + $0xd0] sm:$0xff]
                  %886 = vst [vmem:[%s832 + $0xd0] sm:$0xff] %v885
                  %v887 = vld [vmem:[%s831 + $0xd8] sm:$0xff]
                  %888 = vst [vmem:[%s832 + $0xd8] sm:$0xff] %v887
                  %v889 = vld [vmem:[%s831 + $0xe0] sm:$0xff]
                  %890 = vst [vmem:[%s832 + $0xe0] sm:$0xff] %v889
                  %v891 = vld [vmem:[%s831 + $0xe8] sm:$0xff]
                  %892 = vst [vmem:[%s832 + $0xe8] sm:$0xff] %v891
                  %v893 = vld [vmem:[%s831 + $0xf0] sm:$0xff]
                  %894 = vst [vmem:[%s832 + $0xf0] sm:$0xff] %v893
                  %v895 = vld [vmem:[%s831 + $0xf8] sm:$0xff]
                  %896 = vst [vmem:[%s832 + $0xf8] sm:$0xff] %v895
                  %s897 = sadd.s32 1, %s830
                  %p898 = scmp.ge.s32.totalorder %s897, %s823
                  %s899 = scalar_select %p898, 0, %s897
                  %s900 = smul.u32 %s899, 256
                  %s901 = smul.u32 %s899, 256
                  %s902 = scalar_lea.vmem %s694, %s900 [#allocation2]
                  %s903 = scalar_lea.vmem %s705, %s901
                $region79: #{tpu_custom_call.1} parent=73 // loop_footer
                  %s827 = sadd.s32 %s825, 1
                $region80: #{tpu_custom_call.1} parent=73 // loop_footer_branch
                  %824 = sbr.rel target = $region76
                $region81: #{tpu_custom_call.1} parent=73 // loop_exit
                  _
                %s904 = sshrl.u32 %s701, 5
                %s905 = sand.u32 %s701, 31
                %s906 = smul.u32 %s904, 32
                %s907 = smul.u32 8, %s906
                %s908 = scalar_lea.vmem %s694, %s907 [#allocation2]
                %s909 = smul.u32 8, %s906
                %s910 = scalar_lea.vmem %s705, %s909
                // While loop
                $region82: #{tpu_custom_call.1} parent=73 // loop_pre_header
                  _
                $region83: #{tpu_custom_call.1} parent=73 // loop_header
                  %s912 = sphi 0, %s914
                  %p913 = scmp.ge.s32.totalorder %s912, %s905
                  %s917 = sphi 0, %s924
                  %s918 = sphi %s908, %s927
                  %s919 = sphi %s910, %s928
                $region84: #{tpu_custom_call.1} parent=73 // loop_header_branch
                  %916 = sbr.rel (%p913) target = $region88
                $region85: #{tpu_custom_call.1} parent=73 // loop_body
                  %v920 = vld [vmem:[%s918] sm:$0xff]
                  %921 = vst [vmem:[%s919] sm:$0xff] %v920
                  %s922 = sadd.s32 1, %s917
                  %p923 = scmp.ge.s32.totalorder %s922, %s905
                  %s924 = scalar_select %p923, 0, %s922
                  %s925 = smul.u32 %s924, 8
                  %s926 = smul.u32 %s924, 8
                  %s927 = scalar_lea.vmem %s908, %s925 [#allocation2]
                  %s928 = scalar_lea.vmem %s910, %s926
                $region86: #{tpu_custom_call.1} parent=73 // loop_footer
                  %s914 = sadd.s32 %s912, 1
                $region87: #{tpu_custom_call.1} parent=73 // loop_footer_branch
                  %911 = sbr.rel target = $region83
                $region88: #{tpu_custom_call.1} parent=73 // loop_exit
                  _
              $region74: #{tpu_custom_call.1} parent=51 // pred_fallthru
                _
              // Predicated region
              $region89: #{tpu_custom_call.1} parent=51 // pred_check
                _
              $region90: #{tpu_custom_call.1} parent=51 // pred_check_branch
                %930 = sbr.rel target = $region92
              $region91: #{tpu_custom_call.1} parent=51 // pred_region
                _
              $region92: #{tpu_custom_call.1} parent=51 // pred_fallthru
                _
            $region52: #{tpu_custom_call.1} parent=47 // pred_fallthru
              _
            // Predicated region
            $region53: #{tpu_custom_call.1} parent=47 // pred_check
              _
            $region54: #{tpu_custom_call.1} parent=47 // pred_check_branch
              %712 = sbr.rel target = $region56
            $region55: #{tpu_custom_call.1} parent=47 // pred_region
              %s714 = ssub.s32 256, 1
              %s715 = sshrl.u32 %s701, 5
              // While loop
              $region57: #{tpu_custom_call.1} parent=55 // loop_pre_header
                _
              $region58: #{tpu_custom_call.1} parent=55 // loop_header
                %s717 = sphi 0, %s719
                %p718 = scmp.ge.s32.totalorder %s717, %s715
                %s722 = sphi 0, %s791
                %s723 = sphi %s694, %s794
                %s724 = sphi %s705, %s795
              $region59: #{tpu_custom_call.1} parent=55 // loop_header_branch
                %721 = sbr.rel (%p718) target = $region63
              $region60: #{tpu_custom_call.1} parent=55 // loop_body
                %v725 = vld [vmem:[%s723] sm:%s714]
                %726 = vst [vmem:[%s724] sm:%s714] %v725
                %v727 = vld [vmem:[%s723 + $0x8] sm:%s714]
                %728 = vst [vmem:[%s724 + $0x8] sm:%s714] %v727
                %v729 = vld [vmem:[%s723 + $0x10] sm:%s714]
                %730 = vst [vmem:[%s724 + $0x10] sm:%s714] %v729
                %v731 = vld [vmem:[%s723 + $0x18] sm:%s714]
                %732 = vst [vmem:[%s724 + $0x18] sm:%s714] %v731
                %v733 = vld [vmem:[%s723 + $0x20] sm:%s714]
                %734 = vst [vmem:[%s724 + $0x20] sm:%s714] %v733
                %v735 = vld [vmem:[%s723 + $0x28] sm:%s714]
                %736 = vst [vmem:[%s724 + $0x28] sm:%s714] %v735
                %v737 = vld [vmem:[%s723 + $0x30] sm:%s714]
                %738 = vst [vmem:[%s724 + $0x30] sm:%s714] %v737
                %v739 = vld [vmem:[%s723 + $0x38] sm:%s714]
                %740 = vst [vmem:[%s724 + $0x38] sm:%s714] %v739
                %v741 = vld [vmem:[%s723 + $0x40] sm:%s714]
                %742 = vst [vmem:[%s724 + $0x40] sm:%s714] %v741
                %v743 = vld [vmem:[%s723 + $0x48] sm:%s714]
                %744 = vst [vmem:[%s724 + $0x48] sm:%s714] %v743
                %v745 = vld [vmem:[%s723 + $0x50] sm:%s714]
                %746 = vst [vmem:[%s724 + $0x50] sm:%s714] %v745
                %v747 = vld [vmem:[%s723 + $0x58] sm:%s714]
                %748 = vst [vmem:[%s724 + $0x58] sm:%s714] %v747
                %v749 = vld [vmem:[%s723 + $0x60] sm:%s714]
                %750 = vst [vmem:[%s724 + $0x60] sm:%s714] %v749
                %v751 = vld [vmem:[%s723 + $0x68] sm:%s714]
                %752 = vst [vmem:[%s724 + $0x68] sm:%s714] %v751
                %v753 = vld [vmem:[%s723 + $0x70] sm:%s714]
                %754 = vst [vmem:[%s724 + $0x70] sm:%s714] %v753
                %v755 = vld [vmem:[%s723 + $0x78] sm:%s714]
                %756 = vst [vmem:[%s724 + $0x78] sm:%s714] %v755
                %v757 = vld [vmem:[%s723 + $0x80] sm:%s714]
                %758 = vst [vmem:[%s724 + $0x80] sm:%s714] %v757
                %v759 = vld [vmem:[%s723 + $0x88] sm:%s714]
                %760 = vst [vmem:[%s724 + $0x88] sm:%s714] %v759
                %v761 = vld [vmem:[%s723 + $0x90] sm:%s714]
                %762 = vst [vmem:[%s724 + $0x90] sm:%s714] %v761
                %v763 = vld [vmem:[%s723 + $0x98] sm:%s714]
                %764 = vst [vmem:[%s724 + $0x98] sm:%s714] %v763
                %v765 = vld [vmem:[%s723 + $0xa0] sm:%s714]
                %766 = vst [vmem:[%s724 + $0xa0] sm:%s714] %v765
                %v767 = vld [vmem:[%s723 + $0xa8] sm:%s714]
                %768 = vst [vmem:[%s724 + $0xa8] sm:%s714] %v767
                %v769 = vld [vmem:[%s723 + $0xb0] sm:%s714]
                %770 = vst [vmem:[%s724 + $0xb0] sm:%s714] %v769
                %v771 = vld [vmem:[%s723 + $0xb8] sm:%s714]
                %772 = vst [vmem:[%s724 + $0xb8] sm:%s714] %v771
                %v773 = vld [vmem:[%s723 + $0xc0] sm:%s714]
                %774 = vst [vmem:[%s724 + $0xc0] sm:%s714] %v773
                %v775 = vld [vmem:[%s723 + $0xc8] sm:%s714]
                %776 = vst [vmem:[%s724 + $0xc8] sm:%s714] %v775
                %v777 = vld [vmem:[%s723 + $0xd0] sm:%s714]
                %778 = vst [vmem:[%s724 + $0xd0] sm:%s714] %v777
                %v779 = vld [vmem:[%s723 + $0xd8] sm:%s714]
                %780 = vst [vmem:[%s724 + $0xd8] sm:%s714] %v779
                %v781 = vld [vmem:[%s723 + $0xe0] sm:%s714]
                %782 = vst [vmem:[%s724 + $0xe0] sm:%s714] %v781
                %v783 = vld [vmem:[%s723 + $0xe8] sm:%s714]
                %784 = vst [vmem:[%s724 + $0xe8] sm:%s714] %v783
                %v785 = vld [vmem:[%s723 + $0xf0] sm:%s714]
                %786 = vst [vmem:[%s724 + $0xf0] sm:%s714] %v785
                %v787 = vld [vmem:[%s723 + $0xf8] sm:%s714]
                %788 = vst [vmem:[%s724 + $0xf8] sm:%s714] %v787
                %s789 = sadd.s32 1, %s722
                %p790 = scmp.ge.s32.totalorder %s789, %s715
                %s791 = scalar_select %p790, 0, %s789
                %s792 = smul.u32 %s791, 256
                %s793 = smul.u32 %s791, 256
                %s794 = scalar_lea.vmem %s694, %s792 [#allocation2]
                %s795 = scalar_lea.vmem %s705, %s793
              $region61: #{tpu_custom_call.1} parent=55 // loop_footer
                %s719 = sadd.s32 %s717, 1
              $region62: #{tpu_custom_call.1} parent=55 // loop_footer_branch
                %716 = sbr.rel target = $region58
              $region63: #{tpu_custom_call.1} parent=55 // loop_exit
                _
              %s796 = sshrl.u32 %s701, 5
              %s797 = sand.u32 %s701, 31
              %s798 = smul.u32 %s796, 32
              %s799 = smul.u32 8, %s798
              %s800 = scalar_lea.vmem %s694, %s799 [#allocation2]
              %s801 = smul.u32 8, %s798
              %s802 = scalar_lea.vmem %s705, %s801
              // While loop
              $region64: #{tpu_custom_call.1} parent=55 // loop_pre_header
                _
              $region65: #{tpu_custom_call.1} parent=55 // loop_header
                %s804 = sphi 0, %s806
                %p805 = scmp.ge.s32.totalorder %s804, %s797
                %s809 = sphi 0, %s816
                %s810 = sphi %s800, %s819
                %s811 = sphi %s802, %s820
              $region66: #{tpu_custom_call.1} parent=55 // loop_header_branch
                %808 = sbr.rel (%p805) target = $region70
              $region67: #{tpu_custom_call.1} parent=55 // loop_body
                %v812 = vld [vmem:[%s810] sm:%s714]
                %813 = vst [vmem:[%s811] sm:%s714] %v812
                %s814 = sadd.s32 1, %s809
                %p815 = scmp.ge.s32.totalorder %s814, %s797
                %s816 = scalar_select %p815, 0, %s814
                %s817 = smul.u32 %s816, 8
                %s818 = smul.u32 %s816, 8
                %s819 = scalar_lea.vmem %s800, %s817 [#allocation2]
                %s820 = scalar_lea.vmem %s802, %s818
              $region68: #{tpu_custom_call.1} parent=55 // loop_footer
                %s806 = sadd.s32 %s804, 1
              $region69: #{tpu_custom_call.1} parent=55 // loop_footer_branch
                %803 = sbr.rel target = $region65
              $region70: #{tpu_custom_call.1} parent=55 // loop_exit
                _
            $region56: #{tpu_custom_call.1} parent=47 // pred_fallthru
              _
          $region48: #{tpu_custom_call.1} parent=43 // pred_fallthru
            _
          %931 = vnop
        $region44: #{tpu_custom_call.1} parent=39 // pred_fallthru
          _
      $region40: #{tpu_custom_call.1} parent=5 // pred_fallthru
        _
      %p932 = scmp.le.s32.totalorder 2, %s11
      // Predicated region
      $region93: #{tpu_custom_call.1} parent=5 // pred_check
        %p933 = pneg %p932
      $region94: #{tpu_custom_call.1} parent=5 // pred_check_branch
        %935 = sbr.rel (%p933) target = $region96
      $region95: #{tpu_custom_call.1} parent=5 // pred_region
        %s936 = ssub.s32 %s11, 2
        // Predicated region
        $region97: #{tpu_custom_call.1} parent=95 // pred_check
          %p937 = pneg %p150
        $region98: #{tpu_custom_call.1} parent=95 // pred_check_branch
          %939 = sbr.rel (%p937) target = $region100
        $region99: #{tpu_custom_call.1} parent=95 // pred_region
          %s940 = sand.u32 %s135, 1
          %s941 = sand.u32 %s135, 1
          %s942 = smul.addr %s941, 256
          %s943 = scalar_lea.vmem [#allocation2], %s942
        $region100: #{tpu_custom_call.1} parent=95 // pred_fallthru
          _
      $region96: #{tpu_custom_call.1} parent=5 // pred_fallthru
        _
    $region6: #{tpu_custom_call.1} parent=1 // loop_footer
      %s15 = sadd.s32 1, %s11
    $region7: #{tpu_custom_call.1} parent=1 // loop_footer_branch
      %10 = sbr.rel target = $region3
    $region8: #{tpu_custom_call.1} parent=1 // loop_exit
      _

</llo_original>
